<compile_context>
chip_gen: v6e
topology: v6e:2x2x1
jax: 0.10.0
libtpu: 0.0.40
codegen_flags: <defaults>
</compile_context>

<pallas_src>
import functools

import jax
import jax.numpy as jnp
from jax.experimental import pallas as pl
from jax.experimental.pallas import tpu as pltpu

_LANES = 128
_SUBLANES = 8
_MAX_TILE_ROWS = 4096                    # 4096 x 128 f32 = 2 MiB / input / buffer
_VMEM_LIMIT_BYTES = 32 * 1024 * 1024     # safe on v5e/v6e (128 MiB) and v7x (64 MiB)
_N_CORE_CHUNKS = 2                       # parallel row-chunks -> both v7x TCs


def _cdiv(a, b):
    return -(-a // b)


def _round_up(x, m):
    return _cdiv(x, m) * m


def _dice_partials_kernel(pred_ref, gt_ref, int_ref, sum_ref, *,
                          n_tiles, n_inner, tile_rows, last_tile_rows,
                          oob_tiles):
    """Per-chunk [sum(pred*gt), sum(pred+gt)] partials, kept vreg-shaped (8,128).

    Grid is (n_chunks, n_inner): the chunk axis is "parallel" (one chunk per
    TensorCore on v7x), the inner axis is the sequential reduction.  The final
    cross-sublane/lane reduce and the dice epilogue happen in plain JAX.
    """
    o = pl.program_id(0)
    i = pl.program_id(1)
    t = o * n_inner + i          # logical row-tile index (may be a clamped dup)

    @pl.when(i == 0)
    def _init():
        int_ref[...] = jnp.zeros_like(int_ref)
        sum_ref[...] = jnp.zeros_like(sum_ref)

    def accumulate(mask_rows=None):
        pred = pred_ref[...].astype(jnp.float32)
        gt = gt_ref[...].astype(jnp.float32)
        if mask_rows is not None:
            # Select-mask before any arithmetic so unspecified OOB data of the
            # partial last block cannot propagate.
            rid = jax.lax.broadcasted_iota(jnp.int32, (tile_rows, _LANES), 0)
            valid = rid < mask_rows
            pred = jnp.where(valid, pred, 0.0)
            gt = jnp.where(valid, gt, 0.0)
        # (tile_rows,128) -> (tile_rows//8, 8, 128): tile-aligned (free) reshape;
        # the axis-0 reduce is pure VPU adds (no XLU) into (8,128) accumulators.
        p3 = pred.reshape(tile_rows // _SUBLANES, _SUBLANES, _LANES)
        g3 = gt.reshape(tile_rows // _SUBLANES, _SUBLANES, _LANES)
        int_ref[0] += jnp.sum(p3 * g3, axis=0)
        sum_ref[0] += jnp.sum(p3 + g3, axis=0)

    ragged = last_tile_rows != tile_rows          # python-level flags
    if ragged:
        # Hot path: every full tile, unmasked.
        @pl.when(t < n_tiles - 1)
        def _full():
            accumulate()

        # Only the last (partial) tile pays for the row mask.  Clamped
        # duplicate reads (t > n_tiles - 1, only when oob_tiles) match neither
        # branch and are skipped entirely.
        @pl.when(t == n_tiles - 1)
        def _partial():
            accumulate(mask_rows=last_tile_rows)
    elif oob_tiles:
        @pl.when(t < n_tiles)
        def _full():
            accumulate()
    else:
        accumulate()


def dice_loss(pred, gt, weight, smooth=1.0):
    """Pallas equivalent of DiceLoss.forward(pred, gt, weight, smooth)."""
    # Keep HBM streams narrow: bool gt travels as int8 (1 B/elem); everything
    # else (f32 / bf16 / int) is passed through and cast to f32 in-kernel.
    if gt.dtype == jnp.bool_:
        gt = gt.astype(jnp.int8)

    pred_flat = jnp.reshape(pred, (-1,))
    gt_flat = jnp.reshape(gt, (-1,))
    n = pred_flat.shape[0]

    weight = jnp.asarray(weight, jnp.float32)
    smooth = jnp.asarray(smooth, jnp.float32)

    rows = n // _LANES
    tail = n - rows * _LANES     # < 128 trailing elements, reduced in plain JAX

    tail_int = jnp.float32(0.0)
    tail_sum = jnp.float32(0.0)
    if tail:
        p_t = pred_flat[rows * _LANES:].astype(jnp.float32)
        g_t = gt_flat[rows * _LANES:].astype(jnp.float32)
        tail_int = jnp.sum(p_t * g_t)
        tail_sum = jnp.sum(p_t) + jnp.sum(g_t)

    if rows == 0:
        # Fewer than 128 elements: not worth launching a kernel.
        intersection = tail_int
        denom = tail_sum
    else:
        pred2d = pred_flat[: rows * _LANES].reshape(rows, _LANES)
        gt2d = gt_flat[: rows * _LANES].reshape(rows, _LANES)

        # Tile rows: multiple of 32 (legal second-minor tile for f32/bf16/int8),
        # capped at 4096 (2 MiB f32 per input per pipeline buffer).
        tile_rows = min(_MAX_TILE_ROWS, _round_up(rows, 32))
        if rows < tile_rows:
            # Only the small single-tile unaligned case (<2 MiB): zero-pad a
            # handful of rows so the block shape stays a legal full tile.
            pad_rows = tile_rows - rows
            pred2d = jnp.pad(pred2d, ((0, pad_rows), (0, 0)))
            gt2d = jnp.pad(gt2d, ((0, pad_rows), (0, 0)))
            rows = tile_rows

        n_tiles = _cdiv(rows, tile_rows)
        n_chunks = min(_N_CORE_CHUNKS, n_tiles)
        n_inner = _cdiv(n_tiles, n_chunks)
        oob_tiles = n_chunks * n_inner > n_tiles
        last_tile_rows = rows - (n_tiles - 1) * tile_rows

        if oob_tiles:
            in_idx = lambda o, i: (jnp.minimum(o * n_inner + i, n_tiles - 1), 0)
        else:
            in_idx = lambda o, i: (o * n_inner + i, 0)

        kernel = functools.partial(
            _dice_partials_kernel,
            n_tiles=n_tiles, n_inner=n_inner, tile_rows=tile_rows,
            last_tile_rows=last_tile_rows, oob_tiles=oob_tiles)

        partial_shape = jax.ShapeDtypeStruct(
            (n_chunks, _SUBLANES, _LANES), jnp.float32)
        partial_spec = pl.BlockSpec((1, _SUBLANES, _LANES),
                                    lambda o, i: (o, 0, 0))

        int_partials, sum_partials = pl.pallas_call(
            kernel,
            out_shape=(partial_shape, partial_shape),
            grid=(n_chunks, n_inner),
            in_specs=[
                pl.BlockSpec((tile_rows, _LANES), in_idx),   # pred
                pl.BlockSpec((tile_rows, _LANES), in_idx),   # gt
            ],
            out_specs=(partial_spec, partial_spec),
            compiler_params=pltpu.CompilerParams(
                dimension_semantics=("parallel", "arbitrary"),
                vmem_limit_bytes=_VMEM_LIMIT_BYTES),
        )(pred2d, gt2d)

        intersection = jnp.sum(int_partials) + tail_int
        denom = jnp.sum(sum_partials) + tail_sum

    return -1.0 * weight * (2.0 * intersection + smooth) / (denom + smooth)


def _reference(pred, gt, weight, smooth):
    p = jnp.reshape(pred, (-1,)).astype(jnp.float32)
    g = jnp.reshape(gt, (-1,)).astype(jnp.float32)
    inter = jnp.sum(p * g)
    return (-1.0 * weight * (2.0 * inter + smooth)
            / (jnp.sum(p) + jnp.sum(g) + smooth))


if __name__ == "__main__":
    key = jax.random.PRNGKey(0)
    k1, k2, k3, k4, k5, k6 = jax.random.split(key, 6)

    # Test 1: small NCHW segmentation-style shapes -> single small tile.
    pred1 = jax.nn.sigmoid(jax.random.normal(k1, (2, 4, 16, 16), dtype=jnp.float32))
    gt1 = (jax.random.uniform(k2, (2, 4, 16, 16)) > 0.5).astype(jnp.float32)
    loss1 = dice_loss(pred1, gt1, 1.0, 1.0)
    jax.block_until_ready(loss1)
    ref1 = _reference(pred1, gt1, 1.0, 1.0)
    assert jnp.allclose(loss1, ref1, rtol=1e-5, atol=1e-6), (loss1, ref1)

    # Test 2: 8224 rows -> three 4096-row tiles: exercises the 2-chunk
    # "parallel" axis, the clamped duplicate tile skip and the pl.when-gated
    # ragged last tile.
    pred2 = jax.nn.sigmoid(jax.random.normal(k3, (4, 4, 256, 257), dtype=jnp.float32))
    gt2 = (jax.random.uniform(k4, (4, 4, 256, 257)) > 0.5).astype(jnp.float32)
    loss2 = dice_loss(pred2, gt2, 0.5, 1.0)
    jax.block_until_ready(loss2)
    ref2 = _reference(pred2, gt2, 0.5, 1.0)
    assert jnp.allclose(loss2, ref2, rtol=1e-4, atol=1e-5), (loss2, ref2)

    # Test 3: flat length with a <128-element tail + bool gt (int8 stream).
    pred3 = jax.nn.sigmoid(jax.random.normal(k5, (2, 3, 37, 53), dtype=jnp.float32))
    gt3 = jax.random.uniform(k6, (2, 3, 37, 53)) > 0.5      # bool
    loss3 = dice_loss(pred3, gt3, 2.0, 1.0)
    jax.block_until_ready(loss3)
    ref3 = _reference(pred3, gt3.astype(jnp.float32), 2.0, 1.0)
    assert jnp.allclose(loss3, ref3, rtol=1e-5, atol=1e-6), (loss3, ref3)

    print("KERNEL_OK")
</pallas_src>

<mosaic_0001>
module attributes {stable_mosaic.version = 11 : i64} {
  func.func @_dice_partials_kernel(%arg0: i32, %arg1: i32, %arg2: memref<32x128xf32, #tpu.memory_space<vmem>>, %arg3: memref<32x128xf32, #tpu.memory_space<vmem>>, %arg4: memref<1x8x128xf32, #tpu.memory_space<vmem>>, %arg5: memref<1x8x128xf32, #tpu.memory_space<vmem>>) attributes {dimension_semantics = [#tpu.dimension_semantics<parallel>, #tpu.dimension_semantics<arbitrary>], iteration_bounds = array<i64: 1, 1>, scalar_prefetch = 0 : i64, scratch_operands = 0 : i64, tpu.core_type = #tpu.core_type<tc>, window_params = [{transform_indices = @transform_0, window_bounds = array<i64: 32, 128>}, {transform_indices = @transform_1, window_bounds = array<i64: 32, 128>}, {transform_indices = @transform_2, window_bounds = array<i64: 1, 8, 128>}, {transform_indices = @transform_3, window_bounds = array<i64: 1, 8, 128>}]} {
    %c0_i32 = arith.constant 0 : i32
    %0 = arith.cmpi eq, %arg1, %c0_i32 : i32
    %1 = arith.extui %0 : i1 to i32
    %c0_i32_0 = arith.constant 0 : i32
    %2 = arith.cmpi ne, %1, %c0_i32_0 : i32
    scf.if %2 {
      %cst_17 = arith.constant 0.000000e+00 : f32
      %23 = vector.broadcast %cst_17 : f32 to vector<1x8x128xf32>
      %c0_18 = arith.constant 0 : index
      %c0_19 = arith.constant 0 : index
      %c0_20 = arith.constant 0 : index
      %24 = vector.load %arg4[%c0_18, %c0_19, %c0_20] : memref<1x8x128xf32, #tpu.memory_space<vmem>>, vector<1x8x128xf32>
      tpu.vector_store %arg4[%c0_18, %c0_19, %c0_20], %23 {strides = array<i32>} : memref<1x8x128xf32, #tpu.memory_space<vmem>>, vector<1x8x128xf32>,
      %cst_21 = arith.constant 0.000000e+00 : f32
      %25 = vector.broadcast %cst_21 : f32 to vector<1x8x128xf32>
      %c0_22 = arith.constant 0 : index
      %c0_23 = arith.constant 0 : index
      %c0_24 = arith.constant 0 : index
      %26 = vector.load %arg5[%c0_22, %c0_23, %c0_24] : memref<1x8x128xf32, #tpu.memory_space<vmem>>, vector<1x8x128xf32>
      tpu.vector_store %arg5[%c0_22, %c0_23, %c0_24], %25 {strides = array<i32>} : memref<1x8x128xf32, #tpu.memory_space<vmem>>, vector<1x8x128xf32>,
    } else {
    }
    %c0 = arith.constant 0 : index
    %c0_1 = arith.constant 0 : index
    %3 = vector.load %arg2[%c0, %c0_1] : memref<32x128xf32, #tpu.memory_space<vmem>>, vector<32x128xf32>
    %c0_2 = arith.constant 0 : index
    %c0_3 = arith.constant 0 : index
    %4 = vector.load %arg3[%c0_2, %c0_3] : memref<32x128xf32, #tpu.memory_space<vmem>>, vector<32x128xf32>
    %5 = vector.shape_cast %3 : vector<32x128xf32> to vector<4x8x128xf32>
    %6 = vector.shape_cast %4 : vector<32x128xf32> to vector<4x8x128xf32>
    %c0_4 = arith.constant 0 : index
    %c0_5 = arith.constant 0 : index
    %c0_6 = arith.constant 0 : index
    %7 = vector.load %arg4[%c0_4, %c0_5, %c0_6] : memref<1x8x128xf32, #tpu.memory_space<vmem>>, vector<1x8x128xf32>
    %8 = vector.shape_cast %7 : vector<1x8x128xf32> to vector<8x128xf32>
    %9 = arith.mulf %5, %6 : vector<4x8x128xf32>
    %cst = arith.constant dense<0.000000e+00> : vector<8x128xf32>
    %10 = vector.multi_reduction <add>, %9, %cst [0] : vector<4x8x128xf32> to vector<8x128xf32>
    %11 = arith.addf %8, %10 : vector<8x128xf32>
    %c0_7 = arith.constant 0 : index
    %c0_8 = arith.constant 0 : index
    %c0_9 = arith.constant 0 : index
    %12 = vector.load %arg4[%c0_7, %c0_8, %c0_9] : memref<1x8x128xf32, #tpu.memory_space<vmem>>, vector<1x8x128xf32>
    %13 = vector.shape_cast %12 : vector<1x8x128xf32> to vector<8x128xf32>
    %14 = vector.shape_cast %11 : vector<8x128xf32> to vector<1x8x128xf32>
    tpu.vector_store %arg4[%c0_7, %c0_8, %c0_9], %14 {strides = array<i32>} : memref<1x8x128xf32, #tpu.memory_space<vmem>>, vector<1x8x128xf32>,
    %c0_10 = arith.constant 0 : index
    %c0_11 = arith.constant 0 : index
    %c0_12 = arith.constant 0 : index
    %15 = vector.load %arg5[%c0_10, %c0_11, %c0_12] : memref<1x8x128xf32, #tpu.memory_space<vmem>>, vector<1x8x128xf32>
    %16 = vector.shape_cast %15 : vector<1x8x128xf32> to vector<8x128xf32>
    %17 = arith.addf %5, %6 : vector<4x8x128xf32>
    %cst_13 = arith.constant dense<0.000000e+00> : vector<8x128xf32>
    %18 = vector.multi_reduction <add>, %17, %cst_13 [0] : vector<4x8x128xf32> to vector<8x128xf32>
    %19 = arith.addf %16, %18 : vector<8x128xf32>
    %c0_14 = arith.constant 0 : index
    %c0_15 = arith.constant 0 : index
    %c0_16 = arith.constant 0 : index
    %20 = vector.load %arg5[%c0_14, %c0_15, %c0_16] : memref<1x8x128xf32, #tpu.memory_space<vmem>>, vector<1x8x128xf32>
    %21 = vector.shape_cast %20 : vector<1x8x128xf32> to vector<8x128xf32>
    %22 = vector.shape_cast %19 : vector<8x128xf32> to vector<1x8x128xf32>
    tpu.vector_store %arg5[%c0_14, %c0_15, %c0_16], %22 {strides = array<i32>} : memref<1x8x128xf32, #tpu.memory_space<vmem>>, vector<1x8x128xf32>,
    return
  }
  func.func @transform_0(%arg0: i32, %arg1: i32) -> (i32, i32) {
    %c1_i32 = arith.constant 1 : i32
    %0 = arith.muli %arg0, %c1_i32 : i32
    %1 = arith.addi %0, %arg1 : i32
    %c0_i32 = arith.constant 0 : i32
    %c0_i32_0 = arith.constant 0 : i32
    return %1, %c0_i32 : i32, i32
  }
  func.func @transform_1(%arg0: i32, %arg1: i32) -> (i32, i32) {
    %c1_i32 = arith.constant 1 : i32
    %0 = arith.muli %arg0, %c1_i32 : i32
    %1 = arith.addi %0, %arg1 : i32
    %c0_i32 = arith.constant 0 : i32
    %c0_i32_0 = arith.constant 0 : i32
    return %1, %c0_i32 : i32, i32
  }
  func.func @transform_2(%arg0: i32, %arg1: i32) -> (i32, i32, i32) {
    %c0_i32 = arith.constant 0 : i32
    %c0_i32_0 = arith.constant 0 : i32
    %c0_i32_1 = arith.constant 0 : i32
    return %arg0, %c0_i32, %c0_i32_0 : i32, i32, i32
  }
  func.func @transform_3(%arg0: i32, %arg1: i32) -> (i32, i32, i32) {
    %c0_i32 = arith.constant 0 : i32
    %c0_i32_0 = arith.constant 0 : i32
    %c0_i32_1 = arith.constant 0 : i32
    return %arg0, %c0_i32, %c0_i32_0 : i32, i32, i32
  }
}

</mosaic_0001>

<llo_original>
// kernel: tpu_custom_call.1
$region0: #{tpu_custom_call.1}
  #allocation0 [shape = 'u32[]', space=smem, size = 0x4, offset = 0x4, fixed_abs, tag = 'smem constant byte address 0x4 - core index']
  #allocation1 [shape = 'u32[144,128]{1,0:T(1,128)}', space=vmem, size = 0x12000, scoped, tag = 'internal scratch']
  %s0 = inlined_call_operand.hbm [shape: f32[32,128], index: 0, kind: input, shape index: {}]
  %s1 = inlined_call_operand.hbm [shape: f32[32,128], index: 1, kind: input, shape index: {}]
  %s2 = inlined_call_operand.hbm [shape: f32[1,8,128], index: 2, kind: output, shape index: {0}]
  %s3 = inlined_call_operand.hbm [shape: f32[1,8,128], index: 3, kind: output, shape index: {1}]
  %4 = xla_tuple %s2, %s3
  %s5 = sld [smem:[#allocation0]]
  $region38: #{tpu_custom_call.1} parent=0
    _
  %s7 = ssub.s32 1, %s5
  %s8 = scalar_select 0, %s7, %s5
  $region1: #{tpu_custom_call.1} parent=0
    #allocation2 [shape = 'u8[16384]{0}', space=vmem, size = 0x4000, scoped, tag = 'input window, operand 0, single buffered']
    #allocation3 [shape = 's32[1]{0}', space=sflag, size = 0x4, scoped, tag = 'scoped memory for tpu_custom_call.1']
    #allocation4 [shape = 's32[1]{0}', space=sflag, size = 0x4, scoped, tag = 'scoped memory for tpu_custom_call.1']
    #allocation5 [shape = 'u8[16384]{0}', space=vmem, size = 0x4000, scoped, tag = 'input window, operand 1, single buffered']
    #allocation6 [shape = 's32[1]{0}', space=sflag, size = 0x4, scoped, tag = 'scoped memory for tpu_custom_call.1']
    #allocation7 [shape = 'u8[4096]{0}', space=vmem, size = 0x1000, scoped, tag = 'output window, operand 0, single buffered']
    #allocation8 [shape = 'u8[4096]{0}', space=vmem, size = 0x1000, scoped, tag = 'output window, operand 1, single buffered']
    #allocation9 [shape = 's32[1]{0}', space=sflag, size = 0x4, scoped, tag = 'scoped memory for tpu_custom_call.1']
    %9 = vsyncpa [#allocation3], 0
    %10 = vsyncpa [#allocation6], 0
    %11 = vsyncpa [#allocation4], 0
    %12 = vsyncpa [#allocation9], 0
    // Predicated region
    $region2: #{tpu_custom_call.1} parent=1 // pred_check
      _
    $region3: #{tpu_custom_call.1} parent=1 // pred_check_branch
      %14 = sbr.rel (0) target = $region5
    $region4: #{tpu_custom_call.1} parent=1 // pred_region
      %s15 = sadd.s32 0, 0
      %s16 = smul.u32 4, %s15
      %s18 = ssub.s32 512, 512
      %19 = vsyncadd [#allocation3], %s18
      %s20 = smul.addr %s16, 128
      %s21 = scalar_lea.hbm %s0, %s20
      %s22 = sshll.u32 [#allocation2], 4
      %s23 = int_to_ptr.vmem [resolvable:$true] %s22
      %28 = dma.hbm_to_vmem [thread:$0]  %s21, 512, %s23, [#allocation3], 128, 128, 8
    $region5: #{tpu_custom_call.1} parent=1 // pred_fallthru
      _
    // Predicated region
    $region6: #{tpu_custom_call.1} parent=1 // pred_check
      _
    $region7: #{tpu_custom_call.1} parent=1 // pred_check_branch
      %30 = sbr.rel (0) target = $region9
    $region8: #{tpu_custom_call.1} parent=1 // pred_region
      %s31 = sadd.s32 0, 0
      %s32 = smul.u32 4, %s31
      %s34 = ssub.s32 512, 512
      %35 = vsyncadd [#allocation6], %s34
      %s36 = smul.addr %s32, 128
      %s37 = scalar_lea.hbm %s1, %s36
      %s38 = sshll.u32 [#allocation5], 4
      %s39 = int_to_ptr.vmem [resolvable:$true] %s38
      %44 = dma.hbm_to_vmem [thread:$0]  %s37, 512, %s39, [#allocation6], 128, 128, 8
    $region9: #{tpu_custom_call.1} parent=1 // pred_fallthru
      _
    // Predicated region
    $region10: #{tpu_custom_call.1} parent=1 // pred_check
      _
    $region11: #{tpu_custom_call.1} parent=1 // pred_check_branch
      %46 = sbr.rel (0) target = $region13
    $region12: #{tpu_custom_call.1} parent=1 // pred_region
      %47 = dma.done [#allocation3], 512
    $region13: #{tpu_custom_call.1} parent=1 // pred_fallthru
      _
    // Predicated region
    $region14: #{tpu_custom_call.1} parent=1 // pred_check
      _
    $region15: #{tpu_custom_call.1} parent=1 // pred_check_branch
      %49 = sbr.rel (0) target = $region17
    $region16: #{tpu_custom_call.1} parent=1 // pred_region
      %50 = dma.done [#allocation6], 512
    $region17: #{tpu_custom_call.1} parent=1 // pred_fallthru
      _
    %s51 = sadd.s32 0, 0
    %s52 = smul.u32 4, %s51
    %s53 = sadd.s32 0, 0
    %s54 = smul.u32 4, %s53
    %p55 = scmp.eq.s32.totalorder 0, 0
    // Predicated region
    $region18: #{tpu_custom_call.1} parent=1 // pred_check
      %p56 = pneg %p55
    $region19: #{tpu_custom_call.1} parent=1 // pred_check_branch
      %58 = sbr.rel (%p56) target = $region21
    $region20: #{tpu_custom_call.1} parent=1 // pred_region
      %59 = vst [vmem:[#allocation7] sm:$0xff] 0.0
      %60 = vst [vmem:[#allocation8] sm:$0xff] 0.0
    $region21: #{tpu_custom_call.1} parent=1 // pred_fallthru
      _
    %v61 = vld [vmem:[#allocation2] sm:$0xff]
    %v62 = vld [vmem:[#allocation2 + $0x8] sm:$0xff]
    %v63 = vld [vmem:[#allocation2 + $0x10] sm:$0xff]
    %v64 = vld [vmem:[#allocation2 + $0x18] sm:$0xff]
    %v65 = vld [vmem:[#allocation5] sm:$0xff]
    %v66 = vld [vmem:[#allocation5 + $0x8] sm:$0xff]
    %v67 = vld [vmem:[#allocation5 + $0x10] sm:$0xff]
    %v68 = vld [vmem:[#allocation5 + $0x18] sm:$0xff]
    %v69 = vld [vmem:[#allocation7] sm:$0xff]
    %v70 = vmul.f32 %v61, %v65
    %v71 = vmul.f32 %v62, %v66
    %v72 = vmul.f32 %v63, %v67
    %v73 = vmul.f32 %v64, %v68
    %v74 = vadd.f32 %v70, %v71
    %v75 = vadd.f32 %v74, %v72
    %v76 = vadd.f32 %v75, %v73
    %v77 = vadd.f32 %v69, %v76
    %78 = vst [vmem:[#allocation7] sm:$0xff] %v77
    %v79 = vld [vmem:[#allocation8] sm:$0xff]
    %v80 = vadd.f32 %v61, %v65
    %v81 = vadd.f32 %v62, %v66
    %v82 = vadd.f32 %v63, %v67
    %v83 = vadd.f32 %v64, %v68
    %v84 = vadd.f32 %v80, %v81
    %v85 = vadd.f32 %v84, %v82
    %v86 = vadd.f32 %v85, %v83
    %v87 = vadd.f32 %v79, %v86
    %88 = vst [vmem:[#allocation8] sm:$0xff] %v87
    // Predicated region
    $region22: #{tpu_custom_call.1} parent=1 // pred_check
      _
    $region23: #{tpu_custom_call.1} parent=1 // pred_check_branch
      %90 = sbr.rel (0) target = $region25
    $region24: #{tpu_custom_call.1} parent=1 // pred_region
      %s92 = ssub.s32 128, 128
      %93 = vsyncadd [#allocation4], %s92
      %s95 = sshll.u32 [#allocation7], 4
      %s96 = int_to_ptr.vmem [resolvable:$true] %s95
      %98 = dma.vmem_to_hbm [thread:$0]  %s96, 128, %s2, [#allocation4]
    $region25: #{tpu_custom_call.1} parent=1 // pred_fallthru
      _
    // Predicated region
    $region26: #{tpu_custom_call.1} parent=1 // pred_check
      _
    $region27: #{tpu_custom_call.1} parent=1 // pred_check_branch
      %100 = sbr.rel (0) target = $region29
    $region28: #{tpu_custom_call.1} parent=1 // pred_region
      %s102 = ssub.s32 128, 128
      %103 = vsyncadd [#allocation9], %s102
      %s105 = sshll.u32 [#allocation8], 4
      %s106 = int_to_ptr.vmem [resolvable:$true] %s105
      %108 = dma.vmem_to_hbm [thread:$0]  %s106, 128, %s3, [#allocation9]
    $region29: #{tpu_custom_call.1} parent=1 // pred_fallthru
      _
    // Predicated region
    $region30: #{tpu_custom_call.1} parent=1 // pred_check
      _
    $region31: #{tpu_custom_call.1} parent=1 // pred_check_branch
      %110 = sbr.rel (0) target = $region33
    $region32: #{tpu_custom_call.1} parent=1 // pred_region
      %111 = dma.done [#allocation4], 128
    $region33: #{tpu_custom_call.1} parent=1 // pred_fallthru
      _
    // Predicated region
    $region34: #{tpu_custom_call.1} parent=1 // pred_check
      _
    $region35: #{tpu_custom_call.1} parent=1 // pred_check_branch
      %113 = sbr.rel (0) target = $region37
    $region36: #{tpu_custom_call.1} parent=1 // pred_region
      %114 = dma.done [#allocation9], 128
    $region37: #{tpu_custom_call.1} parent=1 // pred_fallthru
      _
    %115 = vsyncpa [#allocation3], 1
    %116 = vsyncpa [#allocation6], 1
    %117 = vsyncpa [#allocation4], 1
    %118 = vsyncpa [#allocation9], 1

</llo_original>
